<compile_context>
chip_gen: v7x
topology: tpu7x:2x2x1
jax: 0.10.0
libtpu: 0.0.40
codegen_flags: <defaults>
</compile_context>

<pallas_src>
import functools

import jax
import jax.numpy as jnp
from jax.experimental import pallas as pl
from jax.experimental.pallas import tpu as pltpu


# ---------------------------------------------------------------------------
# pltpu.roll direction calibration (guards against convention drift across
# jax versions; runs one tiny kernel, cached).
# ---------------------------------------------------------------------------
@functools.lru_cache(maxsize=None)
def _roll_matches_numpy() -> bool:
    """True iff pltpu.roll(x, s, axis) == jnp.roll(x, s, axis) (elem i -> i+s)."""
    def k(x_ref, o_ref):
        o_ref[...] = pltpu.roll(x_ref[...], shift=1, axis=1)

    x = jnp.arange(8 * 128, dtype=jnp.int32).reshape(8, 128)
    out = pl.pallas_call(k, out_shape=jax.ShapeDtypeStruct((8, 128), jnp.int32))(x)
    if bool(jnp.array_equal(out, jnp.roll(x, 1, axis=1))):
        return True
    if bool(jnp.array_equal(out, jnp.roll(x, -1, axis=1))):
        return False
    raise RuntimeError("unexpected pltpu.roll semantics")


# ---------------------------------------------------------------------------
# Kernel
# ---------------------------------------------------------------------------
def _nonbt_dw_kernel(x_ref, mask_ref,
                     w1dw_ref, s1dw_ref, b1dw_ref, w1pw_ref, s1pw_ref, b1pw_ref,
                     w2dw_ref, s2dw_ref, b2dw_ref, w2pw_ref, s2pw_ref, b2pw_ref,
                     o_ref,
                     *, nb, c, wp, lpad, dilation, roll_numpy):
    """One grid step = `nb` samples; activations in padded-flat (c, lpad) layout.

    lpad = round_up((H+2P)*(W+2P), 128); a 2-D tap offset (di, dj) is one lane
    rotation by di*(W+2P)+dj (XLU), so all VPU/MXU work and stores stay
    lane-dense.  Values outside the valid image region are garbage after each
    stage; they are re-zeroed with `mask` before the dilated depthwise and
    stripped in the wrapper.
    """

    def advance(a, delta):
        # result[q] = a[(q + delta) mod lpad]  (single XLU rotation)
        if delta == 0:
            return a
        amt = (-delta) % lpad if roll_numpy else delta % lpad
        return pltpu.roll(a, shift=amt, axis=1)

    def depthwise3x3(a, w_ref, d):
        # a: (c, lpad) with an exact zero ring of width >= d around the image.
        acc = None
        for ki in range(3):
            for kj in range(3):
                delta = (ki - 1) * d * wp + (kj - 1) * d
                k = ki * 3 + kj
                term = advance(a, delta) * w_ref[:, k:k + 1]      # (c,1) bcast
                acc = term if acc is None else acc + term          # 1st tap inits
        return acc

    def pointwise1x1(a, w_ref):
        if c > 8:
            # Realistic channel counts: channel mix on the MXU.
            return jnp.dot(w_ref[...], a, preferred_element_type=jnp.float32)
        # Tiny c: unrolled VPU FMA avoids MXU relayout overhead.
        out = None
        for ci in range(c):
            term = w_ref[:, ci:ci + 1] * a[ci:ci + 1, :]
            out = term if out is None else out + term
        return out

    mask = mask_ref[...]                                # (1, lpad) interior mask

    for b in range(nb):
        # ---- stage 1: dw3x3 -> BN -> 1x1 -> BN -> ReLU ----------------------
        m = depthwise3x3(x_ref[b], w1dw_ref, 1)
        m = m * s1dw_ref[...] + b1dw_ref[...]
        m = pointwise1x1(m, w1pw_ref)
        m = jnp.maximum(m * s1pw_ref[...] + b1pw_ref[...], 0.0)
        # ---- stage 2: re-impose zero halo, dilated dw3x3 -> BN -> 1x1 -> BN --
        m = m * mask
        m = depthwise3x3(m, w2dw_ref, dilation)
        m = m * s2dw_ref[...] + b2dw_ref[...]
        m = pointwise1x1(m, w2pw_ref)
        m = m * s2pw_ref[...] + b2pw_ref[...]
        # ---- residual add + ReLU (x re-read here; not kept live across stages)
        o_ref[b] = jnp.maximum(m + x_ref[b], 0.0).astype(o_ref.dtype)


# ---------------------------------------------------------------------------
# Wrapper
# ---------------------------------------------------------------------------
def nonbt_dw_forward(x, w1_dw, s1_dw, b1_dw, w1_pw, s1_pw, b1_pw,
                     w2_dw, s2_dw, b2_dw, w2_pw, s2_pw, b2_pw,
                     *, dilation=1, samples_per_step=1):
    """x: (N, C, H, W) NCHW (PyTorch layout).  BatchNorms are given in folded
    inference form (per-channel scale, bias)."""
    N, C, H, W = x.shape
    assert w1_dw.shape == (C, 3, 3) and w2_dw.shape == (C, 3, 3)
    assert w1_pw.shape == (C, C) and w2_pw.shape == (C, C)
    nb = samples_per_step
    assert N % nb == 0

    P = max(1, dilation)                    # halo wide enough for both dw stages
    Hp, Wp = H + 2 * P, W + 2 * P
    L = Hp * Wp
    Lpad = ((L + 127) // 128) * 128         # full 128-lane vregs, unmasked stores

    f32 = jnp.float32
    # Zero-pad once (halo for BOTH depthwise stages), flatten spatial onto the
    # lane axis, round the lane axis up to a multiple of 128 (all free XLA ops).
    xp = jnp.pad(x.astype(f32), ((0, 0), (0, 0), (P, P), (P, P)))
    xp = xp.reshape(N, C, L)
    xp = jnp.pad(xp, ((0, 0), (0, 0), (0, Lpad - L)))

    # Interior mask (1 inside the HxW image, 0 on halo/tail): re-imposes the
    # zero padding ring before the second (dilated) depthwise conv.
    mask2d = jnp.zeros((Hp, Wp), f32).at[P:P + H, P:P + W].set(1.0)
    mask = jnp.pad(mask2d.reshape(1, L), ((0, 0), (0, Lpad - L)))

    col = lambda v: v.astype(f32).reshape(C, 1)      # per-channel BN scale/bias
    dwf = lambda w: w.astype(f32).reshape(C, 9)      # depthwise taps, lane-indexed

    kernel = functools.partial(
        _nonbt_dw_kernel, nb=nb, c=C, wp=Wp, lpad=Lpad, dilation=dilation,
        roll_numpy=_roll_matches_numpy())

    img_spec = pl.BlockSpec((nb, C, Lpad), lambda n: (n, 0, 0))

    def full(*shape):
        nd = len(shape)
        return pl.BlockSpec(shape, lambda n: (0,) * nd)

    out = pl.pallas_call(
        kernel,
        out_shape=jax.ShapeDtypeStruct((N, C, Lpad), f32),
        grid=(N // nb,),
        in_specs=[img_spec, full(1, Lpad),
                  full(C, 9), full(C, 1), full(C, 1),
                  full(C, C), full(C, 1), full(C, 1),
                  full(C, 9), full(C, 1), full(C, 1),
                  full(C, C), full(C, 1), full(C, 1)],
        out_specs=img_spec,
        compiler_params=pltpu.CompilerParams(
            dimension_semantics=("parallel",),
            vmem_limit_bytes=64 * 1024 * 1024),
    )(xp, mask,
      dwf(w1_dw), col(s1_dw), col(b1_dw), w1_pw.astype(f32), col(s1_pw), col(b1_pw),
      dwf(w2_dw), col(s2_dw), col(b2_dw), w2_pw.astype(f32), col(s2_pw), col(b2_pw))

    # Strip the lane tail + halo (pure XLA slice/reshape outside the kernel).
    out = out[:, :, :L].reshape(N, C, Hp, Wp)[:, :, P:P + H, P:P + W]
    return out.astype(x.dtype)


# ---------------------------------------------------------------------------
# Pure-JAX reference (eval-mode BN), mirrors the PyTorch forward.
# ---------------------------------------------------------------------------
def _reference(x, w1_dw, s1_dw, b1_dw, w1_pw, s1_pw, b1_pw,
               w2_dw, s2_dw, b2_dw, w2_pw, s2_pw, b2_pw, *, dilation=1):
    N, C, H, W = x.shape

    def dw(inp, wt, d):
        return jax.lax.conv_general_dilated(
            inp, wt.reshape(C, 1, 3, 3), window_strides=(1, 1),
            padding=((d, d), (d, d)), rhs_dilation=(d, d),
            feature_group_count=C,
            dimension_numbers=('NCHW', 'OIHW', 'NCHW'))

    def bn(inp, s, b):
        return inp * s.reshape(1, C, 1, 1) + b.reshape(1, C, 1, 1)

    m = bn(dw(x, w1_dw, 1), s1_dw, b1_dw)
    m = jnp.einsum('oc,nchw->nohw', w1_pw, m)
    m = jnp.maximum(bn(m, s1_pw, b1_pw), 0.0)
    m = bn(dw(m, w2_dw, dilation), s2_dw, b2_dw)
    m = jnp.einsum('oc,nchw->nohw', w2_pw, m)
    m = bn(m, s2_pw, b2_pw)
    return jnp.maximum(m + x, 0.0)


if __name__ == "__main__":
    eps = 1e-5

    def make_params(key, C):
        ks = jax.random.split(key, 8)
        w1_dw = 0.2 * jax.random.normal(ks[0], (C, 3, 3), jnp.float32)
        w1_pw = 0.3 * jax.random.normal(ks[1], (C, C), jnp.float32)
        w2_dw = 0.2 * jax.random.normal(ks[2], (C, 3, 3), jnp.float32)
        w2_pw = 0.3 * jax.random.normal(ks[3], (C, C), jnp.float32)

        def bn_params(k):
            k1, k2, k3, k4 = jax.random.split(k, 4)
            gamma = 1.0 + 0.1 * jax.random.normal(k1, (C,), jnp.float32)
            beta = 0.1 * jax.random.normal(k2, (C,), jnp.float32)
            mean = 0.05 * jax.random.normal(k3, (C,), jnp.float32)
            var = jax.random.uniform(k4, (C,), jnp.float32, 0.5, 1.5)
            scale = gamma / jnp.sqrt(var + eps)      # fold running stats
            bias = beta - mean * scale
            return scale, bias

        s1_dw, b1_dw = bn_params(ks[4])
        s1_pw, b1_pw = bn_params(ks[5])
        s2_dw, b2_dw = bn_params(ks[6])
        s2_pw, b2_pw = bn_params(ks[7])
        return (w1_dw, s1_dw, b1_dw, w1_pw, s1_pw, b1_pw,
                w2_dw, s2_dw, b2_dw, w2_pw, s2_pw, b2_pw)

    key = jax.random.PRNGKey(0)
    kx, kp_small, kp_big = jax.random.split(key, 3)

    # Config A: tiny channel count (C <= 8 -> unrolled VPU pointwise path),
    # both dilation variants, batch-blocked and per-sample grid steps.
    N, C, H, W = 2, 4, 16, 16
    x = jax.random.normal(kx, (N, C, H, W), jnp.float32)
    params = make_params(kp_small, C)
    for dilation, nb in ((1, 2), (2, 1)):
        out = nonbt_dw_forward(x, *params, dilation=dilation,
                               samples_per_step=nb)
        out = jax.block_until_ready(out)
        ref = _reference(x, *params, dilation=dilation)
        assert out.shape == (N, C, H, W), out.shape
        assert jnp.allclose(out, ref, atol=2e-4, rtol=2e-4), \
            (dilation, nb, float(jnp.max(jnp.abs(out - ref))))

    # Config B: C > 8 -> MXU pointwise path.
    N, C, H, W = 2, 16, 16, 16
    xb = jax.random.normal(kx, (N, C, H, W), jnp.float32)
    params_b = make_params(kp_big, C)
    out = nonbt_dw_forward(xb, *params_b, dilation=1, samples_per_step=1)
    out = jax.block_until_ready(out)
    ref = _reference(xb, *params_b, dilation=1)
    assert out.shape == (N, C, H, W), out.shape
    assert jnp.allclose(out, ref, atol=2e-3, rtol=2e-3), \
        float(jnp.max(jnp.abs(out - ref)))

    print("KERNEL_OK")
</pallas_src>

<mosaic_0001>
module attributes {stable_mosaic.version = 11 : i64} {
  func.func @k(%arg0: memref<8x128xi32, #tpu.memory_space<vmem>>, %arg1: memref<8x128xi32, #tpu.memory_space<vmem>>) attributes {dimension_semantics = [], scalar_prefetch = 0 : i64, scratch_operands = 0 : i64, tpu.core_type = #tpu.core_type<tc>} {
    %c0 = arith.constant 0 : index
    %c0_0 = arith.constant 0 : index
    %0 = vector.load %arg0[%c0, %c0_0] : memref<8x128xi32, #tpu.memory_space<vmem>>, vector<8x128xi32>
    %c1_i32 = arith.constant 1 : i32
    %1 = tpu.dynamic_rotate %0 by %c1_i32 dim 1 : vector<8x128xi32>, i32 -> vector<8x128xi32>
    %c0_1 = arith.constant 0 : index
    %c0_2 = arith.constant 0 : index
    %2 = vector.load %arg1[%c0_1, %c0_2] : memref<8x128xi32, #tpu.memory_space<vmem>>, vector<8x128xi32>
    tpu.vector_store %arg1[%c0_1, %c0_2], %1 {strides = array<i32>} : memref<8x128xi32, #tpu.memory_space<vmem>>, vector<8x128xi32>,
    return
  }
}

</mosaic_0001>

<llo_original>
// kernel: tpu_custom_call.1
$region0: #{tpu_custom_call.1}
  #allocation0 [shape = 'u32[]', space=smem, size = 0x4, offset = 0x4, fixed_abs, tag = 'smem constant byte address 0x4 - core index']
  #allocation1 [shape = 'u32[144,128]{1,0:T(1,128)}', space=vmem, size = 0x12000, scoped, tag = 'internal scratch']
  %s0 = inlined_call_operand.hbm [shape: s32[8,128], index: 0, kind: input, shape index: {}]
  %s1 = inlined_call_operand.hbm [shape: s32[8,128], index: 1, kind: output, shape index: {}]
  %s2 = sld [smem:[#allocation0]]
  $region18: #{tpu_custom_call.1} parent=0
    _
  %s4 = ssub.s32 1, %s2
  %s5 = scalar_select 0, %s4, %s2
  $region1: #{tpu_custom_call.1} parent=0
    #allocation2 [shape = 'u8[4096]{0}', space=vmem, size = 0x1000, scoped, tag = 'input window, operand 0, single buffered']
    #allocation3 [shape = 's32[1]{0}', space=sflag, size = 0x4, scoped, tag = 'scoped memory for tpu_custom_call.1']
    #allocation4 [shape = 's32[1]{0}', space=sflag, size = 0x4, scoped, tag = 'scoped memory for tpu_custom_call.1']
    #allocation5 [shape = 'u8[4096]{0}', space=vmem, size = 0x1000, scoped, tag = 'output window, operand 0, single buffered']
    %6 = vsyncpa [#allocation3], 0
    %7 = vsyncpa [#allocation4], 0
    // Predicated region
    $region2: #{tpu_custom_call.1} parent=1 // pred_check
      _
    $region3: #{tpu_custom_call.1} parent=1 // pred_check_branch
      %9 = sbr.rel (0) target = $region5
    $region4: #{tpu_custom_call.1} parent=1 // pred_region
      %s11 = ssub.s32 128, 128
      %12 = vsyncadd [#allocation3], %s11
      %s14 = sshll.u32 [#allocation2], 4
      %s15 = int_to_ptr.vmem [resolvable:$true] %s14
      %17 = dma.hbm_to_vmem [thread:$0]  %s0, 128, %s15, [#allocation3]
    $region5: #{tpu_custom_call.1} parent=1 // pred_fallthru
      _
    // Predicated region
    $region6: #{tpu_custom_call.1} parent=1 // pred_check
      _
    $region7: #{tpu_custom_call.1} parent=1 // pred_check_branch
      %19 = sbr.rel (0) target = $region9
    $region8: #{tpu_custom_call.1} parent=1 // pred_region
      %20 = dma.done [#allocation3], 128
    $region9: #{tpu_custom_call.1} parent=1 // pred_fallthru
      _
    %v21 = vld [vmem:[#allocation2] sm:$0xff]
    %22 = vrot.lane.b32.xlu0 %v21, 1
    %v23 = vpop.permute.xlu0 %22
    %24 = vst [vmem:[#allocation5] sm:$0xff] %v23
    // Predicated region
    $region10: #{tpu_custom_call.1} parent=1 // pred_check
      _
    $region11: #{tpu_custom_call.1} parent=1 // pred_check_branch
      %26 = sbr.rel (0) target = $region13
    $region12: #{tpu_custom_call.1} parent=1 // pred_region
      %s28 = ssub.s32 128, 128
      %29 = vsyncadd [#allocation4], %s28
      %s31 = sshll.u32 [#allocation5], 4
      %s32 = int_to_ptr.vmem [resolvable:$true] %s31
      %34 = dma.vmem_to_hbm [thread:$0]  %s32, 128, %s1, [#allocation4]
    $region13: #{tpu_custom_call.1} parent=1 // pred_fallthru
      _
    // Predicated region
    $region14: #{tpu_custom_call.1} parent=1 // pred_check
      _
    $region15: #{tpu_custom_call.1} parent=1 // pred_check_branch
      %36 = sbr.rel (0) target = $region17
    $region16: #{tpu_custom_call.1} parent=1 // pred_region
      %37 = dma.done [#allocation4], 128
    $region17: #{tpu_custom_call.1} parent=1 // pred_fallthru
      _
    %38 = vsyncpa [#allocation3], 1
    %39 = vsyncpa [#allocation4], 1

</llo_original>
